<compile_context>
chip_gen: v6e
topology: v6e:2x2x1
jax: 0.10.0
libtpu: 0.0.40
codegen_flags: <defaults>
</compile_context>

<pallas_src>
import functools

import jax
import jax.numpy as jnp
from jax.experimental import pallas as pl
from jax.experimental.pallas import tpu as pltpu

LANE = 128


def _round_up(x, m):
    return (x + m - 1) // m * m


def _pad_nodes(n):
    # keep N_pad divisible by both tile sizes chosen below
    if n <= 256:
        return max(128, _round_up(n, 128))
    return _round_up(n, 512)


def _pad2d(a, rows, cols):
    return jnp.pad(a, ((0, rows - a.shape[0]), (0, cols - a.shape[1])))


# ---------------------------------------------------------------------------
# Pallas kernels
# ---------------------------------------------------------------------------
def _gcn_layer_kernel(adj_ref, h_ref, w_ref, b_ref, o_ref, acc_ref):
    # acc(tm, C_in) accumulates Â_tile @ H_block over the k (column) axis;
    # the small (C_in x C_out) weight matmul + bias + relu run once in the
    # last-k epilogue.
    k = pl.program_id(1)

    @pl.when(k == 0)
    def _():
        acc_ref[...] = jnp.zeros_like(acc_ref)

    acc_ref[...] += jnp.dot(
        adj_ref[...], h_ref[...], preferred_element_type=jnp.float32
    )

    @pl.when(k == pl.num_programs(1) - 1)
    def _():
        y = jnp.dot(
            acc_ref[...], w_ref[...], preferred_element_type=jnp.float32
        ) + b_ref[...]
        o_ref[...] = jnp.maximum(y, 0.0).astype(o_ref.dtype)


def _head_kernel(p_ref, h_ref, w1_ref, b1_ref, w2_ref, b2_ref, o_ref, acc_ref):
    # acc(B, C) accumulates pooled = P_block @ H_block over the node axis;
    # fc1 + relu + fc2 fused in the last-k epilogue.
    # dropout: module evaluated in inference mode (training=False) -> identity.
    k = pl.program_id(0)

    @pl.when(k == 0)
    def _():
        acc_ref[...] = jnp.zeros_like(acc_ref)

    acc_ref[...] += jnp.dot(
        p_ref[...], h_ref[...], preferred_element_type=jnp.float32
    )

    @pl.when(k == pl.num_programs(0) - 1)
    def _():
        z = jnp.dot(
            acc_ref[...], w1_ref[...], preferred_element_type=jnp.float32
        ) + b1_ref[...]
        z = jnp.maximum(z, 0.0)
        # TODO(synk): training-mode dropout would use pltpu.prng_seed/prng_random_bits
        o_ref[...] = jnp.dot(
            z, w2_ref[...], preferred_element_type=jnp.float32
        ) + b2_ref[...]


# ---------------------------------------------------------------------------
# Pallas wrappers
# ---------------------------------------------------------------------------
def gcn_layer(adj_p, h_p, w_p, b_p, *, tm, tk):
    """relu(Â @ H @ W + b) with Â,H in bf16 tiles and f32 accumulation."""
    n_pad = adj_p.shape[0]
    c_in = w_p.shape[0]
    c_out = w_p.shape[1]
    grid = (n_pad // tm, n_pad // tk)
    return pl.pallas_call(
        _gcn_layer_kernel,
        out_shape=jax.ShapeDtypeStruct((n_pad, c_out), jnp.bfloat16),
        grid_spec=pltpu.PrefetchScalarGridSpec(
            num_scalar_prefetch=0,
            grid=grid,
            in_specs=[
                pl.BlockSpec((tm, tk), lambda i, k: (i, k)),        # Â tile (bf16)
                pl.BlockSpec((tk, c_in), lambda i, k: (k, 0)),      # H block (bf16)
                pl.BlockSpec((c_in, c_out), lambda i, k: (0, 0)),   # W (resident, f32)
                pl.BlockSpec((1, c_out), lambda i, k: (0, 0)),      # b (resident, f32)
            ],
            out_specs=pl.BlockSpec((tm, c_out), lambda i, k: (i, 0)),
            scratch_shapes=[pltpu.VMEM((tm, c_in), jnp.float32)],
        ),
        compiler_params=pltpu.CompilerParams(
            dimension_semantics=("parallel", "arbitrary"),
        ),
    )(adj_p, h_p, w_p, b_p)


def pooled_head(pool_p, h_p, w1_p, b1_p, w2_p, b2_p, *, tk):
    """fc2(relu(fc1(global_mean_pool(h)))) fused into one kernel."""
    b_pad = pool_p.shape[0]
    n_pad = pool_p.shape[1]
    c_hid = w1_p.shape[0]
    c_out = w2_p.shape[1]
    grid = (n_pad // tk,)
    return pl.pallas_call(
        _head_kernel,
        out_shape=jax.ShapeDtypeStruct((b_pad, c_out), jnp.float32),
        grid_spec=pltpu.PrefetchScalarGridSpec(
            num_scalar_prefetch=0,
            grid=grid,
            in_specs=[
                pl.BlockSpec((b_pad, tk), lambda k: (0, k)),        # P block (bf16)
                pl.BlockSpec((tk, c_hid), lambda k: (k, 0)),        # H block (bf16)
                pl.BlockSpec((c_hid, c_hid), lambda k: (0, 0)),     # W1
                pl.BlockSpec((1, c_hid), lambda k: (0, 0)),         # b1
                pl.BlockSpec((c_hid, c_out), lambda k: (0, 0)),     # W2
                pl.BlockSpec((1, c_out), lambda k: (0, 0)),         # b2
            ],
            out_specs=pl.BlockSpec((b_pad, c_out), lambda k: (0, 0)),
            scratch_shapes=[pltpu.VMEM((b_pad, c_hid), jnp.float32)],
        ),
        compiler_params=pltpu.CompilerParams(
            dimension_semantics=("arbitrary",),
        ),
    )(pool_p, h_p, w1_p, b1_p, w2_p, b2_p)


# ---------------------------------------------------------------------------
# Graph preprocessing (plain JAX glue)
# ---------------------------------------------------------------------------
def normalized_adjacency(edge_index, num_nodes, edge_weight=None):
    """Â = D^{-1/2}(A + I)D^{-1/2}, aggregating source->target (GCNConv default)."""
    src = edge_index[0]
    dst = edge_index[1]
    if edge_weight is None:
        edge_weight = jnp.ones(src.shape[0], dtype=jnp.float32)
    loop = jnp.arange(num_nodes, dtype=src.dtype)
    src = jnp.concatenate([src, loop])
    dst = jnp.concatenate([dst, loop])
    w = jnp.concatenate([edge_weight.astype(jnp.float32),
                         jnp.ones(num_nodes, dtype=jnp.float32)])
    deg = jnp.zeros(num_nodes, jnp.float32).at[dst].add(w)
    dinv = jnp.where(deg > 0, jax.lax.rsqrt(deg), 0.0)
    norm = dinv[dst] * w * dinv[src]
    adj = jnp.zeros((num_nodes, num_nodes), jnp.float32).at[dst, src].add(norm)
    return adj


def mean_pool_matrix(batch, num_graphs):
    """P[b, i] = 1/|graph b| if node i belongs to graph b."""
    onehot = (batch[None, :] == jnp.arange(num_graphs)[:, None]).astype(jnp.float32)
    counts = onehot.sum(axis=1, keepdims=True)
    return onehot / jnp.maximum(counts, 1.0)


# ---------------------------------------------------------------------------
# Model
# ---------------------------------------------------------------------------
def init_params(key, in_channels, hidden_channels, out_channels, num_hidden_layers=4):
    keys = jax.random.split(key, 3 + num_hidden_layers)

    def dense(k, cin, cout):
        scale = 1.0 / jnp.sqrt(jnp.float32(cin))
        w = jax.random.uniform(k, (cin, cout), jnp.float32, -scale, scale)
        b = jnp.zeros((1, cout), jnp.float32)
        return w, b

    params = {
        "conv1": dense(keys[0], in_channels, hidden_channels),
        "convs": [dense(keys[1 + i], hidden_channels, hidden_channels)
                  for i in range(num_hidden_layers)],
        "fc1": dense(keys[1 + num_hidden_layers], hidden_channels, hidden_channels),
        "fc2": dense(keys[2 + num_hidden_layers], hidden_channels, out_channels),
    }
    return params


def gcn_forward(params, x, edge_index, batch, num_graphs, edge_weight=None):
    num_nodes = x.shape[0]
    in_c = x.shape[1]
    hid_c = params["conv1"][0].shape[1]
    out_c = params["fc2"][0].shape[1]

    # dense graph operators (JAX glue), then pad + bf16 for the tiled kernels
    adj = normalized_adjacency(edge_index, num_nodes, edge_weight)
    pool = mean_pool_matrix(batch, num_graphs)

    n_pad = _pad_nodes(num_nodes)
    tm = min(256, n_pad)      # row tile (multiple of 128, fits v7x 64 MiB VMEM easily)
    tk = min(512, n_pad)      # reduction tile

    c_in_pad = _round_up(in_c, LANE)
    c_hid_pad = _round_up(hid_c, LANE)
    c_out_pad = _round_up(out_c, LANE)
    b_pad = max(8, _round_up(num_graphs, 8))

    adj_p = _pad2d(adj, n_pad, n_pad).astype(jnp.bfloat16)
    pool_p = _pad2d(pool, b_pad, n_pad).astype(jnp.bfloat16)
    h = _pad2d(x.astype(jnp.float32), n_pad, c_in_pad).astype(jnp.bfloat16)

    # conv1 + relu
    w, b = params["conv1"]
    h = gcn_layer(adj_p, h, _pad2d(w, c_in_pad, c_hid_pad),
                  _pad2d(b, 1, c_hid_pad), tm=tm, tk=tk)
    # hidden convs + relu
    for w, b in params["convs"]:
        h = gcn_layer(adj_p, h, _pad2d(w, c_hid_pad, c_hid_pad),
                      _pad2d(b, 1, c_hid_pad), tm=tm, tk=tk)

    # global_mean_pool -> fc1 -> relu -> (eval dropout) -> fc2, fused
    w1, b1 = params["fc1"]
    w2, b2 = params["fc2"]
    out = pooled_head(pool_p, h,
                      _pad2d(w1, c_hid_pad, c_hid_pad), _pad2d(b1, 1, c_hid_pad),
                      _pad2d(w2, c_hid_pad, c_out_pad), _pad2d(b2, 1, c_out_pad),
                      tk=tk)
    return out[:num_graphs, :out_c]


# ---------------------------------------------------------------------------
# Example run
# ---------------------------------------------------------------------------
if __name__ == "__main__":
    in_channels, hidden_channels, out_channels = 8, 32, 4
    num_nodes, num_graphs = 16, 2

    key = jax.random.PRNGKey(0)
    k_param, k_x = jax.random.split(key)

    params = init_params(k_param, in_channels, hidden_channels, out_channels,
                         num_hidden_layers=4)

    x = jax.random.normal(k_x, (num_nodes, in_channels), jnp.float32)

    # simple ring graph (bidirectional edges), nodes 0-7 -> graph 0, 8-15 -> graph 1
    src = jnp.arange(num_nodes, dtype=jnp.int32)
    dst = (src + 1) % num_nodes
    edge_index = jnp.stack(
        [jnp.concatenate([src, dst]), jnp.concatenate([dst, src])], axis=0)
    batch = jnp.concatenate(
        [jnp.zeros(num_nodes // 2, jnp.int32), jnp.ones(num_nodes // 2, jnp.int32)])

    fwd = jax.jit(functools.partial(gcn_forward, num_graphs=num_graphs))
    out = fwd(params, x, edge_index, batch)
    jax.block_until_ready(out)
    assert out.shape == (num_graphs, out_channels)
    print("KERNEL_OK")
</pallas_src>

<mosaic_0001>
module attributes {stable_mosaic.version = 11 : i64} {
  func.func private @main(%arg0: i32) attributes {dimension_semantics = [#tpu.dimension_semantics<core_parallel>], iteration_bounds = array<i64: 2>, tpu.core_type = #tpu.core_type<sc_scalar_subcore>, window_params = []} {
    return
  }
}

module attributes {stable_mosaic.version = 11 : i64} {
  func.func private @main(%arg0: i32) attributes {dimension_semantics = [#tpu.dimension_semantics<core_parallel>], iteration_bounds = array<i64: 2>, tpu.core_type = #tpu.core_type<sc_scalar_subcore>, window_params = []} {
    return
  }
}

module attributes {stable_mosaic.version = 11 : i64} {
  func.func @_head_kernel(%arg0: i32, %arg1: memref<8x128xbf16, #tpu.memory_space<vmem>>, %arg2: memref<128x128xbf16, #tpu.memory_space<vmem>>, %arg3: memref<128x128xf32, #tpu.memory_space<vmem>>, %arg4: memref<1x128xf32, #tpu.memory_space<vmem>>, %arg5: memref<128x128xf32, #tpu.memory_space<vmem>>, %arg6: memref<1x128xf32, #tpu.memory_space<vmem>>, %arg7: memref<8x128xf32, #tpu.memory_space<vmem>>, %arg8: memref<8x128xf32, #tpu.memory_space<vmem>>) attributes {dimension_semantics = [#tpu.dimension_semantics<arbitrary>], iteration_bounds = array<i64: 1>, scalar_prefetch = 0 : i64, scratch_operands = 1 : i64, tpu.core_type = #tpu.core_type<tc>, window_params = [{transform_indices = @transform_0, window_bounds = array<i64: 8, 128>}, {transform_indices = @transform_1, window_bounds = array<i64: 128, 128>}, {pipeline_mode = #tpu.pipeline_mode<synchronous>, transform_indices = @transform_2, window_bounds = array<i64: 128, 128>}, {pipeline_mode = #tpu.pipeline_mode<synchronous>, transform_indices = @transform_3, window_bounds = array<i64: 1, 128>}, {pipeline_mode = #tpu.pipeline_mode<synchronous>, transform_indices = @transform_4, window_bounds = array<i64: 128, 128>}, {pipeline_mode = #tpu.pipeline_mode<synchronous>, transform_indices = @transform_5, window_bounds = array<i64: 1, 128>}, {pipeline_mode = #tpu.pipeline_mode<synchronous>, transform_indices = @transform_6, window_bounds = array<i64: 8, 128>}]} {
    %c0_i32 = arith.constant 0 : i32
    %0 = arith.cmpi eq, %arg0, %c0_i32 : i32
    %1 = arith.extui %0 : i1 to i32
    %c0_i32_0 = arith.constant 0 : i32
    %2 = arith.cmpi ne, %1, %c0_i32_0 : i32
    scf.if %2 {
      %cst_10 = arith.constant 0.000000e+00 : f32
      %12 = vector.broadcast %cst_10 : f32 to vector<8x128xf32>
      %c0_11 = arith.constant 0 : index
      %c0_12 = arith.constant 0 : index
      %13 = vector.load %arg8[%c0_11, %c0_12] : memref<8x128xf32, #tpu.memory_space<vmem>>, vector<8x128xf32>
      tpu.vector_store %arg8[%c0_11, %c0_12], %12 {strides = array<i32>} : memref<8x128xf32, #tpu.memory_space<vmem>>, vector<8x128xf32>,
    } else {
    }
    %c0 = arith.constant 0 : index
    %c0_1 = arith.constant 0 : index
    %3 = vector.load %arg8[%c0, %c0_1] : memref<8x128xf32, #tpu.memory_space<vmem>>, vector<8x128xf32>
    %c0_2 = arith.constant 0 : index
    %c0_3 = arith.constant 0 : index
    %4 = vector.load %arg1[%c0_2, %c0_3] : memref<8x128xbf16, #tpu.memory_space<vmem>>, vector<8x128xbf16>
    %c0_4 = arith.constant 0 : index
    %c0_5 = arith.constant 0 : index
    %5 = vector.load %arg2[%c0_4, %c0_5] : memref<128x128xbf16, #tpu.memory_space<vmem>>, vector<128x128xbf16>
    %cst = arith.constant dense<0.000000e+00> : vector<8x128xf32>
    %6 = tpu.matmul %4, %5, %cst {dimension_numbers = #tpu.dot_dimension_numbers<[1], [0], [0], [1], [0, 0, 1, 1], [], []>} : vector<8x128xbf16>, vector<128x128xbf16>, vector<8x128xf32> -> vector<8x128xf32>
    %7 = arith.addf %3, %6 : vector<8x128xf32>
    %c0_6 = arith.constant 0 : index
    %c0_7 = arith.constant 0 : index
    %8 = vector.load %arg8[%c0_6, %c0_7] : memref<8x128xf32, #tpu.memory_space<vmem>>, vector<8x128xf32>
    tpu.vector_store %arg8[%c0_6, %c0_7], %7 {strides = array<i32>} : memref<8x128xf32, #tpu.memory_space<vmem>>, vector<8x128xf32>,
    %c0_i32_8 = arith.constant 0 : i32
    %9 = arith.cmpi eq, %arg0, %c0_i32_8 : i32
    %10 = arith.extui %9 : i1 to i32
    %c0_i32_9 = arith.constant 0 : i32
    %11 = arith.cmpi ne, %10, %c0_i32_9 : i32
    scf.if %11 {
      %c0_10 = arith.constant 0 : index
      %c0_11 = arith.constant 0 : index
      %12 = vector.load %arg8[%c0_10, %c0_11] : memref<8x128xf32, #tpu.memory_space<vmem>>, vector<8x128xf32>
      %c0_12 = arith.constant 0 : index
      %c0_13 = arith.constant 0 : index
      %13 = vector.load %arg3[%c0_12, %c0_13] : memref<128x128xf32, #tpu.memory_space<vmem>>, vector<128x128xf32>
      %cst_14 = arith.constant dense<0.000000e+00> : vector<8x128xf32>
      %14 = tpu.matmul %12, %13, %cst_14 {dimension_numbers = #tpu.dot_dimension_numbers<[1], [0], [0], [1], [0, 0, 1, 1], [], []>} : vector<8x128xf32>, vector<128x128xf32>, vector<8x128xf32> -> vector<8x128xf32>
      %c0_15 = arith.constant 0 : index
      %c0_16 = arith.constant 0 : index
      %15 = vector.load %arg4[%c0_15, %c0_16] : memref<1x128xf32, #tpu.memory_space<vmem>>, vector<1x128xf32>
      %16 = vector.broadcast %15 : vector<1x128xf32> to vector<8x128xf32>
      %17 = arith.addf %14, %16 : vector<8x128xf32>
      %cst_17 = arith.constant 0.000000e+00 : f32
      %18 = vector.broadcast %cst_17 : f32 to vector<8x128xf32>
      %19 = arith.maximumf %17, %18 : vector<8x128xf32>
      %c0_18 = arith.constant 0 : index
      %c0_19 = arith.constant 0 : index
      %20 = vector.load %arg5[%c0_18, %c0_19] : memref<128x128xf32, #tpu.memory_space<vmem>>, vector<128x128xf32>
      %cst_20 = arith.constant dense<0.000000e+00> : vector<8x128xf32>
      %21 = tpu.matmul %19, %20, %cst_20 {dimension_numbers = #tpu.dot_dimension_numbers<[1], [0], [0], [1], [0, 0, 1, 1], [], []>} : vector<8x128xf32>, vector<128x128xf32>, vector<8x128xf32> -> vector<8x128xf32>
      %c0_21 = arith.constant 0 : index
      %c0_22 = arith.constant 0 : index
      %22 = vector.load %arg6[%c0_21, %c0_22] : memref<1x128xf32, #tpu.memory_space<vmem>>, vector<1x128xf32>
      %23 = vector.broadcast %22 : vector<1x128xf32> to vector<8x128xf32>
      %24 = arith.addf %21, %23 : vector<8x128xf32>
      %c0_23 = arith.constant 0 : index
      %c0_24 = arith.constant 0 : index
      %25 = vector.load %arg7[%c0_23, %c0_24] : memref<8x128xf32, #tpu.memory_space<vmem>>, vector<8x128xf32>
      tpu.vector_store %arg7[%c0_23, %c0_24], %24 {strides = array<i32>} : memref<8x128xf32, #tpu.memory_space<vmem>>, vector<8x128xf32>,
    } else {
    }
    return
  }
  func.func @transform_0(%arg0: i32) -> (i32, i32) {
    %c0_i32 = arith.constant 0 : i32
    %c0_i32_0 = arith.constant 0 : i32
    return %c0_i32, %arg0 : i32, i32
  }
  func.func @transform_1(%arg0: i32) -> (i32, i32) {
    %c0_i32 = arith.constant 0 : i32
    %c0_i32_0 = arith.constant 0 : i32
    return %arg0, %c0_i32 : i32, i32
  }
  func.func @transform_2(%arg0: i32) -> (i32, i32) {
    %c0_i32 = arith.constant 0 : i32
    %c0_i32_0 = arith.constant 0 : i32
    %c0_i32_1 = arith.constant 0 : i32
    return %c0_i32, %c0_i32_0 : i32, i32
  }
  func.func @transform_3(%arg0: i32) -> (i32, i32) {
    %c0_i32 = arith.constant 0 : i32
    %c0_i32_0 = arith.constant 0 : i32
    %c0_i32_1 = arith.constant 0 : i32
    return %c0_i32, %c0_i32_0 : i32, i32
  }
  func.func @transform_4(%arg0: i32) -> (i32, i32) {
    %c0_i32 = arith.constant 0 : i32
    %c0_i32_0 = arith.constant 0 : i32
    %c0_i32_1 = arith.constant 0 : i32
    return %c0_i32, %c0_i32_0 : i32, i32
  }
  func.func @transform_5(%arg0: i32) -> (i32, i32) {
    %c0_i32 = arith.constant 0 : i32
    %c0_i32_0 = arith.constant 0 : i32
    %c0_i32_1 = arith.constant 0 : i32
    return %c0_i32, %c0_i32_0 : i32, i32
  }
  func.func @transform_6(%arg0: i32) -> (i32, i32) {
    %c0_i32 = arith.constant 0 : i32
    %c0_i32_0 = arith.constant 0 : i32
    %c0_i32_1 = arith.constant 0 : i32
    return %c0_i32, %c0_i32_0 : i32, i32
  }
}

module attributes {stable_mosaic.version = 11 : i64} {
  func.func @_gcn_layer_kernel(%arg0: i32, %arg1: i32, %arg2: memref<128x128xbf16, #tpu.memory_space<vmem>>, %arg3: memref<128x128xbf16, #tpu.memory_space<vmem>>, %arg4: memref<128x128xf32, #tpu.memory_space<vmem>>, %arg5: memref<1x128xf32, #tpu.memory_space<vmem>>, %arg6: memref<128x128xbf16, #tpu.memory_space<vmem>>, %arg7: memref<128x128xf32, #tpu.memory_space<vmem>>) attributes {dimension_semantics = [#tpu.dimension_semantics<parallel>, #tpu.dimension_semantics<arbitrary>], iteration_bounds = array<i64: 1, 1>, scalar_prefetch = 0 : i64, scratch_operands = 1 : i64, tpu.core_type = #tpu.core_type<tc>, window_params = [{transform_indices = @transform_0, window_bounds = array<i64: 128, 128>}, {transform_indices = @transform_1, window_bounds = array<i64: 128, 128>}, {pipeline_mode = #tpu.pipeline_mode<synchronous>, transform_indices = @transform_2, window_bounds = array<i64: 128, 128>}, {pipeline_mode = #tpu.pipeline_mode<synchronous>, transform_indices = @transform_3, window_bounds = array<i64: 1, 128>}, {transform_indices = @transform_4, window_bounds = array<i64: 128, 128>}]} {
    %c0_i32 = arith.constant 0 : i32
    %0 = arith.cmpi eq, %arg1, %c0_i32 : i32
    %1 = arith.extui %0 : i1 to i32
    %c0_i32_0 = arith.constant 0 : i32
    %2 = arith.cmpi ne, %1, %c0_i32_0 : i32
    scf.if %2 {
      %cst_10 = arith.constant 0.000000e+00 : f32
      %12 = vector.broadcast %cst_10 : f32 to vector<128x128xf32>
      %c0_11 = arith.constant 0 : index
      %c0_12 = arith.constant 0 : index
      %13 = vector.load %arg7[%c0_11, %c0_12] : memref<128x128xf32, #tpu.memory_space<vmem>>, vector<128x128xf32>
      tpu.vector_store %arg7[%c0_11, %c0_12], %12 {strides = array<i32>} : memref<128x128xf32, #tpu.memory_space<vmem>>, vector<128x128xf32>,
    } else {
    }
    %c0 = arith.constant 0 : index
    %c0_1 = arith.constant 0 : index
    %3 = vector.load %arg7[%c0, %c0_1] : memref<128x128xf32, #tpu.memory_space<vmem>>, vector<128x128xf32>
    %c0_2 = arith.constant 0 : index
    %c0_3 = arith.constant 0 : index
    %4 = vector.load %arg2[%c0_2, %c0_3] : memref<128x128xbf16, #tpu.memory_space<vmem>>, vector<128x128xbf16>
    %c0_4 = arith.constant 0 : index
    %c0_5 = arith.constant 0 : index
    %5 = vector.load %arg3[%c0_4, %c0_5] : memref<128x128xbf16, #tpu.memory_space<vmem>>, vector<128x128xbf16>
    %cst = arith.constant dense<0.000000e+00> : vector<128x128xf32>
    %6 = tpu.matmul %4, %5, %cst {dimension_numbers = #tpu.dot_dimension_numbers<[1], [0], [0], [1], [0, 0, 1, 1], [], []>} : vector<128x128xbf16>, vector<128x128xbf16>, vector<128x128xf32> -> vector<128x128xf32>
    %7 = arith.addf %3, %6 : vector<128x128xf32>
    %c0_6 = arith.constant 0 : index
    %c0_7 = arith.constant 0 : index
    %8 = vector.load %arg7[%c0_6, %c0_7] : memref<128x128xf32, #tpu.memory_space<vmem>>, vector<128x128xf32>
    tpu.vector_store %arg7[%c0_6, %c0_7], %7 {strides = array<i32>} : memref<128x128xf32, #tpu.memory_space<vmem>>, vector<128x128xf32>,
    %c0_i32_8 = arith.constant 0 : i32
    %9 = arith.cmpi eq, %arg1, %c0_i32_8 : i32
    %10 = arith.extui %9 : i1 to i32
    %c0_i32_9 = arith.constant 0 : i32
    %11 = arith.cmpi ne, %10, %c0_i32_9 : i32
    scf.if %11 {
      %c0_10 = arith.constant 0 : index
      %c0_11 = arith.constant 0 : index
      %12 = vector.load %arg7[%c0_10, %c0_11] : memref<128x128xf32, #tpu.memory_space<vmem>>, vector<128x128xf32>
      %c0_12 = arith.constant 0 : index
      %c0_13 = arith.constant 0 : index
      %13 = vector.load %arg4[%c0_12, %c0_13] : memref<128x128xf32, #tpu.memory_space<vmem>>, vector<128x128xf32>
      %cst_14 = arith.constant dense<0.000000e+00> : vector<128x128xf32>
      %14 = tpu.matmul %12, %13, %cst_14 {dimension_numbers = #tpu.dot_dimension_numbers<[1], [0], [0], [1], [0, 0, 1, 1], [], []>} : vector<128x128xf32>, vector<128x128xf32>, vector<128x128xf32> -> vector<128x128xf32>
      %c0_15 = arith.constant 0 : index
      %c0_16 = arith.constant 0 : index
      %15 = vector.load %arg5[%c0_15, %c0_16] : memref<1x128xf32, #tpu.memory_space<vmem>>, vector<1x128xf32>
      %16 = vector.broadcast %15 : vector<1x128xf32> to vector<128x128xf32>
      %17 = arith.addf %14, %16 : vector<128x128xf32>
      %cst_17 = arith.constant 0.000000e+00 : f32
      %18 = vector.broadcast %cst_17 : f32 to vector<128x128xf32>
      %19 = arith.maximumf %17, %18 : vector<128x128xf32>
      %20 = arith.truncf %19 : vector<128x128xf32> to vector<128x128xbf16>
      %c0_18 = arith.constant 0 : index
      %c0_19 = arith.constant 0 : index
      %21 = vector.load %arg6[%c0_18, %c0_19] : memref<128x128xbf16, #tpu.memory_space<vmem>>, vector<128x128xbf16>
      tpu.vector_store %arg6[%c0_18, %c0_19], %20 {strides = array<i32>} : memref<128x128xbf16, #tpu.memory_space<vmem>>, vector<128x128xbf16>,
    } else {
    }
    return
  }
  func.func @transform_0(%arg0: i32, %arg1: i32) -> (i32, i32) {
    %c0_i32 = arith.constant 0 : i32
    return %arg0, %arg1 : i32, i32
  }
  func.func @transform_1(%arg0: i32, %arg1: i32) -> (i32, i32) {
    %c0_i32 = arith.constant 0 : i32
    %c0_i32_0 = arith.constant 0 : i32
    return %arg1, %c0_i32 : i32, i32
  }
  func.func @transform_2(%arg0: i32, %arg1: i32) -> (i32, i32) {
    %c0_i32 = arith.constant 0 : i32
    %c0_i32_0 = arith.constant 0 : i32
    %c0_i32_1 = arith.constant 0 : i32
    return %c0_i32, %c0_i32_0 : i32, i32
  }
  func.func @transform_3(%arg0: i32, %arg1: i32) -> (i32, i32) {
    %c0_i32 = arith.constant 0 : i32
    %c0_i32_0 = arith.constant 0 : i32
    %c0_i32_1 = arith.constant 0 : i32
    return %c0_i32, %c0_i32_0 : i32, i32
  }
  func.func @transform_4(%arg0: i32, %arg1: i32) -> (i32, i32) {
    %c0_i32 = arith.constant 0 : i32
    %c0_i32_0 = arith.constant 0 : i32
    return %arg0, %c0_i32 : i32, i32
  }
}

</mosaic_0001>

<llo_original>
// kernel: mul.1
$region0: #{mul.1}
  #allocation0 [shape = 's32[1]{0}', space=sflag, size = 0x4, scoped, tag = 'scoped memory for mul.1']
  %s0 = inlined_call_operand.vmem [shape: f32[48], index: 0, kind: input, shape index: {}]
  %s1 = inlined_call_operand.vmem [shape: f32[48], index: 1, kind: input, shape index: {}]
  %s2 = inlined_call_operand.vmem [shape: f32[48], index: 2, kind: output, shape index: {}]
  %v3 = vld [vmem:[%s0] sm:$0x1]
  %v4 = vld [vmem:[%s1] sm:$0x1]
  %5 = xla_tuple %v3, %v4
  %6 = xla_tuple %5
  %v7 = vmul.f32 %v3, %v4
  %8 = xla_tuple %v7
  %9 = vst [vmem:[%s2] sm:$0x1] %v7

// kernel: gcn_forward.11
$region0: #{gcn_forward.11}
  #allocation0 [shape = 'u32[]', space=smem, size = 0x4, offset = 0x4, fixed_abs, tag = 'smem constant byte address 0x4 - core index']
  #allocation1 [shape = 'u32[144,128]{1,0:T(1,128)}', space=vmem, size = 0x12000, scoped, tag = 'internal scratch']
  #allocation2 [shape = 'f32[8,128]{1,0:T(8,128)}', space=vmem, size = 0x1000, scoped, tag = 'scratch operand']
  %s0 = inlined_call_operand.vmem [shape: bf16[8,128], index: 0, kind: input, shape index: {}]
  %s1 = inlined_call_operand.vmem [shape: bf16[128,128], index: 1, kind: input, shape index: {}]
  %s2 = inlined_call_operand.vmem [shape: f32[128,128], index: 2, kind: input, shape index: {}]
  %s3 = inlined_call_operand.vmem [shape: f32[1,128], index: 3, kind: input, shape index: {}]
  %s4 = inlined_call_operand.vmem [shape: f32[128,128], index: 4, kind: input, shape index: {}]
  %s5 = inlined_call_operand.vmem [shape: f32[1,128], index: 5, kind: input, shape index: {}]
  %s6 = inlined_call_operand.vmem [shape: f32[8,128], index: 6, kind: output, shape index: {}]
  %s7 = sld [smem:[#allocation0]]
  $region42: #{gcn_forward.11} parent=0
    _
  %s9 = ssub.s32 1, %s7
  %s10 = scalar_select 0, %s9, %s7
  // Predicated region
  $region2: #{gcn_forward.11} parent=0 // pred_check
    _
  $region3: #{gcn_forward.11} parent=0 // pred_check_branch
    %12 = sbr.rel (0) target = $region5
  $region4: #{gcn_forward.11} parent=0 // pred_region
    _
  $region5: #{gcn_forward.11} parent=0 // pred_fallthru
    _
  // Predicated region
  $region6: #{gcn_forward.11} parent=0 // pred_check
    _
  $region7: #{gcn_forward.11} parent=0 // pred_check_branch
    %14 = sbr.rel (0) target = $region9
  $region8: #{gcn_forward.11} parent=0 // pred_region
    _
  $region9: #{gcn_forward.11} parent=0 // pred_fallthru
    _
  // Predicated region
  $region10: #{gcn_forward.11} parent=0 // pred_check
    _
  $region11: #{gcn_forward.11} parent=0 // pred_check_branch
    %16 = sbr.rel (0) target = $region13
  $region12: #{gcn_forward.11} parent=0 // pred_region
    _
  $region13: #{gcn_forward.11} parent=0 // pred_fallthru
    _
  // Predicated region
  $region14: #{gcn_forward.11} parent=0 // pred_check
    _
  $region15: #{gcn_forward.11} parent=0 // pred_check_branch
    %18 = sbr.rel (0) target = $region17
  $region16: #{gcn_forward.11} parent=0 // pred_region
    _
  $region17: #{gcn_forward.11} parent=0 // pred_fallthru
    _
  // Predicated region
  $region18: #{gcn_forward.11} parent=0 // pred_check
    _
  $region19: #{gcn_forward.11} parent=0 // pred_check_branch
    %20 = sbr.rel (0) target = $region21
  $region20: #{gcn_forward.11} parent=0 // pred_region
    _
  $region21: #{gcn_forward.11} parent=0 // pred_fallthru
    _
  // Predicated region
  $region22: #{gcn_forward.11} parent=0 // pred_check
    _
  $region23: #{gcn_forward.11} parent=0 // pred_check_branch
    %22 = sbr.rel (0) target = $region25
  $region24: #{gcn_forward.11} parent=0 // pred_region
    _
  $region25: #{gcn_forward.11} parent=0 // pred_fallthru
    _
  %p24 = scmp.eq.s32.totalorder 0, 0
  // Predicated region
  $region26: #{gcn_forward.11} parent=0 // pred_check
    %p25 = pneg %p24
  $region27: #{gcn_forward.11} parent=0 // pred_check_branch
    %27 = sbr.rel (%p25) target = $region29
  $region28: #{gcn_forward.11} parent=0 // pred_region
    %28 = vst [vmem:[#allocation2] sm:$0xff] 0.0
  $region29: #{gcn_forward.11} parent=0 // pred_fallthru
    _
  %v29 = vld [vmem:[#allocation2] sm:$0xff]
  %v30 = vld [vmem:[%s0] sm:$0xf]
  %v31 = vld [vmem:[%s1] sm:$0xf]
  %v32 = vld [vmem:[%s1 + $0x4] sm:$0xf]
  %v33 = vld [vmem:[%s1 + $0x8] sm:$0xf]
  %v34 = vld [vmem:[%s1 + $0xc] sm:$0xf]
  %v35 = vld [vmem:[%s1 + $0x10] sm:$0xf]
  %v36 = vld [vmem:[%s1 + $0x14] sm:$0xf]
  %v37 = vld [vmem:[%s1 + $0x18] sm:$0xf]
  %v38 = vld [vmem:[%s1 + $0x1c] sm:$0xf]
  %v39 = vld [vmem:[%s1 + $0x20] sm:$0xf]
  %v40 = vld [vmem:[%s1 + $0x24] sm:$0xf]
  %v41 = vld [vmem:[%s1 + $0x28] sm:$0xf]
  %v42 = vld [vmem:[%s1 + $0x2c] sm:$0xf]
  %v43 = vld [vmem:[%s1 + $0x30] sm:$0xf]
  %v44 = vld [vmem:[%s1 + $0x34] sm:$0xf]
  %v45 = vld [vmem:[%s1 + $0x38] sm:$0xf]
  %v46 = vld [vmem:[%s1 + $0x3c] sm:$0xf]
  %v63 = vunpack.c.l.b16 %v31
  %v64 = vunpack.c.l.b16 %v32
  %v65 = vunpack.c.l.b16 %v33
  %v66 = vunpack.c.l.b16 %v34
  %v67 = vunpack.c.l.b16 %v35
  %v68 = vunpack.c.l.b16 %v36
  %v69 = vunpack.c.l.b16 %v37
  %v70 = vunpack.c.l.b16 %v38
  %v71 = vunpack.c.l.b16 %v39
  %v72 = vunpack.c.l.b16 %v40
  %v73 = vunpack.c.l.b16 %v41
  %v74 = vunpack.c.l.b16 %v42
  %v75 = vunpack.c.l.b16 %v43
  %v76 = vunpack.c.l.b16 %v44
  %v77 = vunpack.c.l.b16 %v45
  %v78 = vunpack.c.l.b16 %v46
  %v79 = vpack.c.b16 %v64, %v63
  %v80 = vpack.c.b16 %v66, %v65
  %v81 = vpack.c.b16 %v68, %v67
  %v82 = vpack.c.b16 %v70, %v69
  %v83 = vpack.c.b16 %v72, %v71
  %v84 = vpack.c.b16 %v74, %v73
  %v85 = vpack.c.b16 %v76, %v75
  %v86 = vpack.c.b16 %v78, %v77
  %95 = vmatprep.subr.bf16.mxu0 0
  %96 = vmatpush1.bf16.msra.mxu0 %v86
  %97 = vmatprep.subr.bf16.mxu0 0
  %98 = vmatpush1.bf16.msra.mxu0 %v85
  %99 = vmatprep.subr.bf16.mxu0 0
  %100 = vmatpush1.bf16.msra.mxu0 %v84
  %101 = vmatprep.subr.bf16.mxu0 0
  %102 = vmatpush1.bf16.msra.mxu0 %v83
  %103 = vmatprep.subr.bf16.mxu0 0
  %104 = vmatpush1.bf16.msra.mxu0 %v82
  %105 = vmatprep.subr.bf16.mxu0 0
  %106 = vmatpush1.bf16.msra.mxu0 %v81
  %107 = vmatprep.subr.bf16.mxu0 0
  %108 = vmatpush1.bf16.msra.mxu0 %v80
  %109 = vmatprep.subr.bf16.mxu0 0
  %110 = vmatpush1.bf16.msra.mxu0 %v79
  %111 = vmatprep.subr.bf16.mxu0 0
  %112 = vmatpush2.bf16.msra.mxu0 0
  %113 = vmatprep.subr.bf16.mxu0 0
  %114 = vmatpush2.bf16.msra.mxu0 0
  %115 = vmatprep.subr.bf16.mxu0 0
  %116 = vmatpush2.bf16.msra.mxu0 0
  %117 = vmatprep.subr.bf16.mxu0 0
  %118 = vmatpush2.bf16.msra.mxu0 0
  %119 = vmatprep.subr.bf16.mxu0 0
  %120 = vmatpush2.bf16.msra.mxu0 0
  %121 = vmatprep.subr.bf16.mxu0 0
  %122 = vmatpush2.bf16.msra.mxu0 0
  %123 = vmatprep.subr.bf16.mxu0 0
  %124 = vmatpush2.bf16.msra.mxu0 0
  %125 = vmatprep.subr.bf16.mxu0 0
  %126 = vmatpush2.bf16.msra.mxu0 0
  %127 = vmatprep.mubr.bf16.mxu0 0
  %128 = vmatmul.mubr.bf16.gmra.mxu0 %v30
  %v129 = vpop.f32.mrf.mxu0
  %v130 = vadd.f32 0.0, %v129
  %v131 = vpop.f32.mrf.mxu0
  %v132 = vpop.f32.mrf.mxu0
  %v133 = vpop.f32.mrf.mxu0
  %134 = vdwg.mxu0
  %v135 = vadd.f32 %v29, %v130
  %136 = vst [vmem:[#allocation2] sm:$0xff] %v135
  // Predicated region
  $region30: #{gcn_forward.11} parent=0 // pred_check
    %p137 = pneg %p24
  $region31: #{gcn_forward.11} parent=0 // pred_check_branch
    %139 = sbr.rel (%p137) target = $region33
  $region32: #{gcn_forward.11} parent=0 // pred_region
    %v140 = vld [vmem:[#allocation2] sm:$0xff]
    %v141 = vld [vmem:[%s2] sm:$0xff]
    %v142 = vld [vmem:[%s2 + $0x8] sm:$0xff]
    %v143 = vld [vmem:[%s2 + $0x10] sm:$0xff]
    %v144 = vld [vmem:[%s2 + $0x18] sm:$0xff]
    %v145 = vld [vmem:[%s2 + $0x20] sm:$0xff]
    %v146 = vld [vmem:[%s2 + $0x28] sm:$0xff]
    %v147 = vld [vmem:[%s2 + $0x30] sm:$0xff]
    %v148 = vld [vmem:[%s2 + $0x38] sm:$0xff]
    %v149 = vld [vmem:[%s2 + $0x40] sm:$0xff]
    %v150 = vld [vmem:[%s2 + $0x48] sm:$0xff]
    %v151 = vld [vmem:[%s2 + $0x50] sm:$0xff]
    %v152 = vld [vmem:[%s2 + $0x58] sm:$0xff]
    %v153 = vld [vmem:[%s2 + $0x60] sm:$0xff]
    %v154 = vld [vmem:[%s2 + $0x68] sm:$0xff]
    %v155 = vld [vmem:[%s2 + $0x70] sm:$0xff]
    %v156 = vld [vmem:[%s2 + $0x78] sm:$0xff]
    %v157 = vld [vmem:[%s3] sm:$0x1]
    %v159 = vlaneseq
    %v160 = vshrl.u32 %v159, 7
    %v161 = vsub.s32 0, %v160
    %v162 = vrot.slane %v157, %v161
    %164 = vmatprep.subr.mxu0 0.0
    %165 = vmatpush1.msra.mxu0 %v156
    %166 = vmatprep.subr.mxu0 0.0
    %167 = vmatpush1.msra.mxu0 %v155
    %168 = vmatprep.subr.mxu0 0.0
    %169 = vmatpush1.msra.mxu0 %v154
    %170 = vmatprep.subr.mxu0 0.0
    %171 = vmatpush1.msra.mxu0 %v153
    %172 = vmatprep.subr.mxu0 0.0
    %173 = vmatpush1.msra.mxu0 %v152
    %174 = vmatprep.subr.mxu0 0.0
    %175 = vmatpush1.msra.mxu0 %v151
    %176 = vmatprep.subr.mxu0 0.0
    %177 = vmatpush1.msra.mxu0 %v150
    %178 = vmatprep.subr.mxu0 0.0
    %179 = vmatpush1.msra.mxu0 %v149
    %180 = vmatprep.subr.mxu0 0.0
    %181 = vmatpush1.msra.mxu0 %v148
    %182 = vmatprep.subr.mxu0 0.0
    %183 = vmatpush1.msra.mxu0 %v147
    %184 = vmatprep.subr.mxu0 0.0
    %185 = vmatpush1.msra.mxu0 %v146
    %186 = vmatprep.subr.mxu0 0.0
    %187 = vmatpush1.msra.mxu0 %v145
    %188 = vmatprep.subr.mxu0 0.0
    %189 = vmatpush1.msra.mxu0 %v144
    %190 = vmatprep.subr.mxu0 0.0
    %191 = vmatpush1.msra.mxu0 %v143
    %192 = vmatprep.subr.mxu0 0.0
    %193 = vmatpush1.msra.mxu0 %v142
    %194 = vmatprep.subr.mxu0 0.0
    %195 = vmatpush1.msra.mxu0 %v141
    %196 = vmatprep.subr.mxu0 0.0
    %197 = vmatpush2.msra.mxu0 0.0
    %198 = vmatprep.subr.mxu0 0.0
    %199 = vmatpush2.msra.mxu0 0.0
    %200 = vmatprep.subr.mxu0 0.0
    %201 = vmatpush2.msra.mxu0 0.0
    %202 = vmatprep.subr.mxu0 0.0
    %203 = vmatpush2.msra.mxu0 0.0
    %204 = vmatprep.subr.mxu0 0.0
    %205 = vmatpush2.msra.mxu0 0.0
    %206 = vmatprep.subr.mxu0 0.0
    %207 = vmatpush2.msra.mxu0 0.0
    %208 = vmatprep.subr.mxu0 0.0
    %209 = vmatpush2.msra.mxu0 0.0
    %210 = vmatprep.subr.mxu0 0.0
    %211 = vmatpush2.msra.mxu0 0.0
    %212 = vmatprep.subr.mxu0 0.0
    %213 = vmatpush2.msra.mxu0 0.0
    %214 = vmatprep.subr.mxu0 0.0
    %215 = vmatpush2.msra.mxu0 0.0
    %216 = vmatprep.subr.mxu0 0.0
    %217 = vmatpush2.msra.mxu0 0.0
    %218 = vmatprep.subr.mxu0 0.0
    %219 = vmatpush2.msra.mxu0 0.0
    %220 = vmatprep.subr.mxu0 0.0
    %221 = vmatpush2.msra.mxu0 0.0
    %222 = vmatprep.subr.mxu0 0.0
    %223 = vmatpush2.msra.mxu0 0.0
    %224 = vmatprep.subr.mxu0 0.0
    %225 = vmatpush2.msra.mxu0 0.0
    %226 = vmatprep.subr.mxu0 0.0
    %227 = vmatpush2.msra.mxu0 0.0
    %228 = vmatprep.mubr.f32.mxu0 0.0
    %229 = vmatmul.mubr.f32.gmra.mxu0 %v140
    %v230 = vpop.f32.mrf.mxu0
    %v231 = vadd.f32 %v162, %v230
    %v232 = vpop.f32.mrf.mxu0
    %233 = vdwg.mxu0
    %v234 = vmax.f32 %v231, 0.0
    %v235 = vld [vmem:[%s4] sm:$0xff]
    %v236 = vld [vmem:[%s4 + $0x8] sm:$0xff]
    %v237 = vld [vmem:[%s4 + $0x10] sm:$0xff]
    %v238 = vld [vmem:[%s4 + $0x18] sm:$0xff]
    %v239 = vld [vmem:[%s4 + $0x20] sm:$0xff]
    %v240 = vld [vmem:[%s4 + $0x28] sm:$0xff]
    %v241 = vld [vmem:[%s4 + $0x30] sm:$0xff]
    %v242 = vld [vmem:[%s4 + $0x38] sm:$0xff]
    %v243 = vld [vmem:[%s4 + $0x40] sm:$0xff]
    %v244 = vld [vmem:[%s4 + $0x48] sm:$0xff]
    %v245 = vld [vmem:[%s4 + $0x50] sm:$0xff]
    %v246 = vld [vmem:[%s4 + $0x58] sm:$0xff]
    %v247 = vld [vmem:[%s4 + $0x60] sm:$0xff]
    %v248 = vld [vmem:[%s4 + $0x68] sm:$0xff]
    %v249 = vld [vmem:[%s4 + $0x70] sm:$0xff]
    %v250 = vld [vmem:[%s4 + $0x78] sm:$0xff]
    %v251 = vld [vmem:[%s5] sm:$0x1]
    %v253 = vlaneseq
    %v254 = vshrl.u32 %v253, 7
    %v255 = vsub.s32 0, %v254
    %v256 = vrot.slane %v251, %v255
    %258 = vmatprep.subr.mxu0 0.0
    %259 = vmatpush1.msra.mxu0 %v250
    %260 = vmatprep.subr.mxu0 0.0
    %261 = vmatpush1.msra.mxu0 %v249
    %262 = vmatprep.subr.mxu0 0.0
    %263 = vmatpush1.msra.mxu0 %v248
    %264 = vmatprep.subr.mxu0 0.0
    %265 = vmatpush1.msra.mxu0 %v247
    %266 = vmatprep.subr.mxu0 0.0
    %267 = vmatpush1.msra.mxu0 %v246
    %268 = vmatprep.subr.mxu0 0.0
    %269 = vmatpush1.msra.mxu0 %v245
    %270 = vmatprep.subr.mxu0 0.0
    %271 = vmatpush1.msra.mxu0 %v244
    %272 = vmatprep.subr.mxu0 0.0
    %273 = vmatpush1.msra.mxu0 %v243
    %274 = vmatprep.subr.mxu0 0.0
    %275 = vmatpush1.msra.mxu0 %v242
    %276 = vmatprep.subr.mxu0 0.0
    %277 = vmatpush1.msra.mxu0 %v241
    %278 = vmatprep.subr.mxu0 0.0
    %279 = vmatpush1.msra.mxu0 %v240
    %280 = vmatprep.subr.mxu0 0.0
    %281 = vmatpush1.msra.mxu0 %v239
    %282 = vmatprep.subr.mxu0 0.0
    %283 = vmatpush1.msra.mxu0 %v238
    %284 = vmatprep.subr.mxu0 0.0
    %285 = vmatpush1.msra.mxu0 %v237
    %286 = vmatprep.subr.mxu0 0.0
    %287 = vmatpush1.msra.mxu0 %v236
    %288 = vmatprep.subr.mxu0 0.0
    %289 = vmatpush1.msra.mxu0 %v235
    %290 = vmatprep.subr.mxu0 0.0
    %291 = vmatpush2.msra.mxu0 0.0
    %292 = vmatprep.subr.mxu0 0.0
    %293 = vmatpush2.msra.mxu0 0.0
    %294 = vmatprep.subr.mxu0 0.0
    %295 = vmatpush2.msra.mxu0 0.0
    %296 = vmatprep.subr.mxu0 0.0
    %297 = vmatpush2.msra.mxu0 0.0
    %298 = vmatprep.subr.mxu0 0.0
    %299 = vmatpush2.msra.mxu0 0.0
    %300 = vmatprep.subr.mxu0 0.0
    %301 = vmatpush2.msra.mxu0 0.0
    %302 = vmatprep.subr.mxu0 0.0
    %303 = vmatpush2.msra.mxu0 0.0
    %304 = vmatprep.subr.mxu0 0.0
    %305 = vmatpush2.msra.mxu0 0.0
    %306 = vmatprep.subr.mxu0 0.0
    %307 = vmatpush2.msra.mxu0 0.0
    %308 = vmatprep.subr.mxu0 0.0
    %309 = vmatpush2.msra.mxu0 0.0
    %310 = vmatprep.subr.mxu0 0.0
    %311 = vmatpush2.msra.mxu0 0.0
    %312 = vmatprep.subr.mxu0 0.0
    %313 = vmatpush2.msra.mxu0 0.0
    %314 = vmatprep.subr.mxu0 0.0
    %315 = vmatpush2.msra.mxu0 0.0
    %316 = vmatprep.subr.mxu0 0.0
    %317 = vmatpush2.msra.mxu0 0.0
    %318 = vmatprep.subr.mxu0 0.0
    %319 = vmatpush2.msra.mxu0 0.0
    %320 = vmatprep.subr.mxu0 0.0
    %321 = vmatpush2.msra.mxu0 0.0
    %322 = vmatprep.mubr.f32.mxu0 0.0
    %323 = vmatmul.mubr.f32.gmra.mxu0 %v234
    %v324 = vpop.f32.mrf.mxu0
    %v325 = vadd.f32 %v256, %v324
    %v326 = vpop.f32.mrf.mxu0
    %327 = vdwg.mxu0
    %328 = vst [vmem:[%s6] sm:$0xff] %v325
  $region33: #{gcn_forward.11} parent=0 // pred_fallthru
    _
  // Predicated region
  $region34: #{gcn_forward.11} parent=0 // pred_check
    _
  $region35: #{gcn_forward.11} parent=0 // pred_check_branch
    %330 = sbr.rel (0) target = $region37
  $region36: #{gcn_forward.11} parent=0 // pred_region
    _
  $region37: #{gcn_forward.11} parent=0 // pred_fallthru
    _
  // Predicated region
  $region38: #{gcn_forward.11} parent=0 // pred_check
    _
  $region39: #{gcn_forward.11} parent=0 // pred_check_branch
    %332 = sbr.rel (0) target = $region41
  $region40: #{gcn_forward.11} parent=0 // pred_region
    _
  $region41: #{gcn_forward.11} parent=0 // pred_fallthru
    _

// kernel: gcn_forward.6
$region0: #{gcn_forward.6}
  #allocation0 [shape = 'u32[]', space=smem, size = 0x4, offset = 0x4, fixed_abs, tag = 'smem constant byte address 0x4 - core index']
  #allocation1 [shape = 'u32[144,128]{1,0:T(1,128)}', space=vmem, size = 0x12000, scoped, tag = 'internal scratch']
  #allocation2 [shape = 'f32[128,128]{1,0:T(8,128)}', space=vmem, size = 0x10000, scoped, tag = 'scratch operand']
  %s0 = inlined_call_operand.vmem [shape: bf16[128,128], index: 0, kind: input, shape index: {}]
  %s1 = inlined_call_operand.vmem [shape: bf16[128,128], index: 1, kind: input, shape index: {}]
  %s2 = inlined_call_operand.vmem [shape: f32[128,128], index: 2, kind: input, shape index: {}]
  %s3 = inlined_call_operand.vmem [shape: f32[1,128], index: 3, kind: input, shape index: {}]
  %s4 = inlined_call_operand.vmem [shape: bf16[128,128], index: 4, kind: output, shape index: {}]
  %s5 = sld [smem:[#allocation0]]
  $region34: #{gcn_forward.6} parent=0
    _
  %s7 = ssub.s32 1, %s5
  %s8 = scalar_select 0, %s7, %s5
  // Predicated region
  $region2: #{gcn_forward.6} parent=0 // pred_check
    _
  $region3: #{gcn_forward.6} parent=0 // pred_check_branch
    %10 = sbr.rel (0) target = $region5
  $region4: #{gcn_forward.6} parent=0 // pred_region
    _
  $region5: #{gcn_forward.6} parent=0 // pred_fallthru
    _
  // Predicated region
  $region6: #{gcn_forward.6} parent=0 // pred_check
    _
  $region7: #{gcn_forward.6} parent=0 // pred_check_branch
    %12 = sbr.rel (0) target = $region9
  $region8: #{gcn_forward.6} parent=0 // pred_region
    _
  $region9: #{gcn_forward.6} parent=0 // pred_fallthru
    _
  // Predicated region
  $region10: #{gcn_forward.6} parent=0 // pred_check
    _
  $region11: #{gcn_forward.6} parent=0 // pred_check_branch
    %14 = sbr.rel (0) target = $region13
  $region12: #{gcn_forward.6} parent=0 // pred_region
    _
  $region13: #{gcn_forward.6} parent=0 // pred_fallthru
    _
  // Predicated region
  $region14: #{gcn_forward.6} parent=0 // pred_check
    _
  $region15: #{gcn_forward.6} parent=0 // pred_check_branch
    %16 = sbr.rel (0) target = $region17
  $region16: #{gcn_forward.6} parent=0 // pred_region
    _
  $region17: #{gcn_forward.6} parent=0 // pred_fallthru
    _
  %p18 = scmp.eq.s32.totalorder 0, 0
  // Predicated region
  $region18: #{gcn_forward.6} parent=0 // pred_check
    %p19 = pneg %p18
  $region19: #{gcn_forward.6} parent=0 // pred_check_branch
    %21 = sbr.rel (%p19) target = $region21
  $region20: #{gcn_forward.6} parent=0 // pred_region
    %22 = vst [vmem:[#allocation2] sm:$0xff] 0.0
    %23 = vst [vmem:[#allocation2 + $0x8] sm:$0xff] 0.0
    %24 = vst [vmem:[#allocation2 + $0x10] sm:$0xff] 0.0
    %25 = vst [vmem:[#allocation2 + $0x18] sm:$0xff] 0.0
    %26 = vst [vmem:[#allocation2 + $0x20] sm:$0xff] 0.0
    %27 = vst [vmem:[#allocation2 + $0x28] sm:$0xff] 0.0
    %28 = vst [vmem:[#allocation2 + $0x30] sm:$0xff] 0.0
    %29 = vst [vmem:[#allocation2 + $0x38] sm:$0xff] 0.0
    %30 = vst [vmem:[#allocation2 + $0x40] sm:$0xff] 0.0
    %31 = vst [vmem:[#allocation2 + $0x48] sm:$0xff] 0.0
    %32 = vst [vmem:[#allocation2 + $0x50] sm:$0xff] 0.0
    %33 = vst [vmem:[#allocation2 + $0x58] sm:$0xff] 0.0
    %34 = vst [vmem:[#allocation2 + $0x60] sm:$0xff] 0.0
    %35 = vst [vmem:[#allocation2 + $0x68] sm:$0xff] 0.0
    %36 = vst [vmem:[#allocation2 + $0x70] sm:$0xff] 0.0
    %37 = vst [vmem:[#allocation2 + $0x78] sm:$0xff] 0.0
  $region21: #{gcn_forward.6} parent=0 // pred_fallthru
    _
  %v38 = vld [vmem:[#allocation2] sm:$0xff]
  %v39 = vld [vmem:[#allocation2 + $0x8] sm:$0xff]
  %v40 = vld [vmem:[#allocation2 + $0x10] sm:$0xff]
  %v41 = vld [vmem:[#allocation2 + $0x18] sm:$0xff]
  %v42 = vld [vmem:[#allocation2 + $0x20] sm:$0xff]
  %v43 = vld [vmem:[#allocation2 + $0x28] sm:$0xff]
  %v44 = vld [vmem:[#allocation2 + $0x30] sm:$0xff]
  %v45 = vld [vmem:[#allocation2 + $0x38] sm:$0xff]
  %v46 = vld [vmem:[#allocation2 + $0x40] sm:$0xff]
  %v47 = vld [vmem:[#allocation2 + $0x48] sm:$0xff]
  %v48 = vld [vmem:[#allocation2 + $0x50] sm:$0xff]
  %v49 = vld [vmem:[#allocation2 + $0x58] sm:$0xff]
  %v50 = vld [vmem:[#allocation2 + $0x60] sm:$0xff]
  %v51 = vld [vmem:[#allocation2 + $0x68] sm:$0xff]
  %v52 = vld [vmem:[#allocation2 + $0x70] sm:$0xff]
  %v53 = vld [vmem:[#allocation2 + $0x78] sm:$0xff]
  %v54 = vld [vmem:[%s0] sm:$0xf]
  %v55 = vld [vmem:[%s0 + $0x4] sm:$0xf]
  %v56 = vld [vmem:[%s0 + $0x8] sm:$0xf]
  %v57 = vld [vmem:[%s0 + $0xc] sm:$0xf]
  %v58 = vld [vmem:[%s0 + $0x10] sm:$0xf]
  %v59 = vld [vmem:[%s0 + $0x14] sm:$0xf]
  %v60 = vld [vmem:[%s0 + $0x18] sm:$0xf]
  %v61 = vld [vmem:[%s0 + $0x1c] sm:$0xf]
  %v62 = vld [vmem:[%s0 + $0x20] sm:$0xf]
  %v63 = vld [vmem:[%s0 + $0x24] sm:$0xf]
  %v64 = vld [vmem:[%s0 + $0x28] sm:$0xf]
  %v65 = vld [vmem:[%s0 + $0x2c] sm:$0xf]
  %v66 = vld [vmem:[%s0 + $0x30] sm:$0xf]
  %v67 = vld [vmem:[%s0 + $0x34] sm:$0xf]
  %v68 = vld [vmem:[%s0 + $0x38] sm:$0xf]
  %v69 = vld [vmem:[%s0 + $0x3c] sm:$0xf]
  %v70 = vld [vmem:[%s1] sm:$0xf]
  %v71 = vld [vmem:[%s1 + $0x4] sm:$0xf]
  %v72 = vld [vmem:[%s1 + $0x8] sm:$0xf]
  %v73 = vld [vmem:[%s1 + $0xc] sm:$0xf]
  %v74 = vld [vmem:[%s1 + $0x10] sm:$0xf]
  %v75 = vld [vmem:[%s1 + $0x14] sm:$0xf]
  %v76 = vld [vmem:[%s1 + $0x18] sm:$0xf]
  %v77 = vld [vmem:[%s1 + $0x1c] sm:$0xf]
  %v78 = vld [vmem:[%s1 + $0x20] sm:$0xf]
  %v79 = vld [vmem:[%s1 + $0x24] sm:$0xf]
  %v80 = vld [vmem:[%s1 + $0x28] sm:$0xf]
  %v81 = vld [vmem:[%s1 + $0x2c] sm:$0xf]
  %v82 = vld [vmem:[%s1 + $0x30] sm:$0xf]
  %v83 = vld [vmem:[%s1 + $0x34] sm:$0xf]
  %v84 = vld [vmem:[%s1 + $0x38] sm:$0xf]
  %v85 = vld [vmem:[%s1 + $0x3c] sm:$0xf]
  %v102 = vunpack.c.l.b16 %v54
  %v103 = vunpack.c.l.b16 %v55
  %v104 = vunpack.c.l.b16 %v56
  %v105 = vunpack.c.l.b16 %v57
  %v106 = vunpack.c.l.b16 %v58
  %v107 = vunpack.c.l.b16 %v59
  %v108 = vunpack.c.l.b16 %v60
  %v109 = vunpack.c.l.b16 %v61
  %v110 = vunpack.c.l.b16 %v62
  %v111 = vunpack.c.l.b16 %v63
  %v112 = vunpack.c.l.b16 %v64
  %v113 = vunpack.c.l.b16 %v65
  %v114 = vunpack.c.l.b16 %v66
  %v115 = vunpack.c.l.b16 %v67
  %v116 = vunpack.c.l.b16 %v68
  %v117 = vunpack.c.l.b16 %v69
  %v118 = vpack.c.b16 %v103, %v102
  %v119 = vpack.c.b16 %v105, %v104
  %v120 = vpack.c.b16 %v107, %v106
  %v121 = vpack.c.b16 %v109, %v108
  %v122 = vpack.c.b16 %v111, %v110
  %v123 = vpack.c.b16 %v113, %v112
  %v124 = vpack.c.b16 %v115, %v114
  %v125 = vpack.c.b16 %v117, %v116
  %v150 = vunpack.c.l.b16 %v70
  %v151 = vunpack.c.l.b16 %v71
  %v152 = vunpack.c.l.b16 %v72
  %v153 = vunpack.c.l.b16 %v73
  %v154 = vunpack.c.l.b16 %v74
  %v155 = vunpack.c.l.b16 %v75
  %v156 = vunpack.c.l.b16 %v76
  %v157 = vunpack.c.l.b16 %v77
  %v158 = vunpack.c.l.b16 %v78
  %v159 = vunpack.c.l.b16 %v79
  %v160 = vunpack.c.l.b16 %v80
  %v161 = vunpack.c.l.b16 %v81
  %v162 = vunpack.c.l.b16 %v82
  %v163 = vunpack.c.l.b16 %v83
  %v164 = vunpack.c.l.b16 %v84
  %v165 = vunpack.c.l.b16 %v85
  %v166 = vpack.c.b16 %v151, %v150
  %v167 = vpack.c.b16 %v153, %v152
  %v168 = vpack.c.b16 %v155, %v154
  %v169 = vpack.c.b16 %v157, %v156
  %v170 = vpack.c.b16 %v159, %v158
  %v171 = vpack.c.b16 %v161, %v160
  %v172 = vpack.c.b16 %v163, %v162
  %v173 = vpack.c.b16 %v165, %v164
  %182 = vmatprep.subr.bf16.mxu0 0
  %183 = vmatpush1.bf16.msra.mxu0 %v173
  %184 = vmatprep.subr.bf16.mxu0 0
  %185 = vmatpush1.bf16.msra.mxu0 %v172
  %186 = vmatprep.subr.bf16.mxu0 0
  %187 = vmatpush1.bf16.msra.mxu0 %v171
  %188 = vmatprep.subr.bf16.mxu0 0
  %189 = vmatpush1.bf16.msra.mxu0 %v170
  %190 = vmatprep.subr.bf16.mxu0 0
  %191 = vmatpush1.bf16.msra.mxu0 %v169
  %192 = vmatprep.subr.bf16.mxu0 0
  %193 = vmatpush1.bf16.msra.mxu0 %v168
  %194 = vmatprep.subr.bf16.mxu0 0
  %195 = vmatpush1.bf16.msra.mxu0 %v167
  %196 = vmatprep.subr.bf16.mxu0 0
  %197 = vmatpush1.bf16.msra.mxu0 %v166
  %198 = vmatprep.subr.bf16.mxu0 0
  %199 = vmatpush2.bf16.msra.mxu0 0
  %200 = vmatprep.subr.bf16.mxu0 0
  %201 = vmatpush2.bf16.msra.mxu0 0
  %202 = vmatprep.subr.bf16.mxu0 0
  %203 = vmatpush2.bf16.msra.mxu0 0
  %204 = vmatprep.subr.bf16.mxu0 0
  %205 = vmatpush2.bf16.msra.mxu0 0
  %206 = vmatprep.subr.bf16.mxu0 0
  %207 = vmatpush2.bf16.msra.mxu0 0
  %208 = vmatprep.subr.bf16.mxu0 0
  %209 = vmatpush2.bf16.msra.mxu0 0
  %210 = vmatprep.subr.bf16.mxu0 0
  %211 = vmatpush2.bf16.msra.mxu0 0
  %212 = vmatprep.subr.bf16.mxu0 0
  %213 = vmatpush2.bf16.msra.mxu0 0
  %214 = vmatprep.mubr.bf16.mxu0 0
  %215 = vmatmul.mubr.bf16.gmra.mxu0 %v118
  %v216 = vpop.f32.mrf.mxu0
  %v217 = vadd.f32 0.0, %v216
  %v218 = vpop.f32.mrf.mxu0
  %v219 = vpop.f32.mrf.mxu0
  %v220 = vadd.f32 0.0, %v219
  %v221 = vpop.f32.mrf.mxu0
  %222 = vmatprep.mubr.bf16.mxu0 0
  %223 = vmatmul.mubr.bf16.gmra.mxu0 %v119
  %v224 = vpop.f32.mrf.mxu0
  %v225 = vadd.f32 0.0, %v224
  %v226 = vpop.f32.mrf.mxu0
  %v227 = vpop.f32.mrf.mxu0
  %v228 = vadd.f32 0.0, %v227
  %v229 = vpop.f32.mrf.mxu0
  %230 = vmatprep.mubr.bf16.mxu0 0
  %231 = vmatmul.mubr.bf16.gmra.mxu0 %v120
  %v232 = vpop.f32.mrf.mxu0
  %v233 = vadd.f32 0.0, %v232
  %v234 = vpop.f32.mrf.mxu0
  %v235 = vpop.f32.mrf.mxu0
  %v236 = vadd.f32 0.0, %v235
  %v237 = vpop.f32.mrf.mxu0
  %238 = vmatprep.mubr.bf16.mxu0 0
  %239 = vmatmul.mubr.bf16.gmra.mxu0 %v121
  %v240 = vpop.f32.mrf.mxu0
  %v241 = vadd.f32 0.0, %v240
  %v242 = vpop.f32.mrf.mxu0
  %v243 = vpop.f32.mrf.mxu0
  %v244 = vadd.f32 0.0, %v243
  %v245 = vpop.f32.mrf.mxu0
  %246 = vmatprep.mubr.bf16.mxu0 0
  %247 = vmatmul.mubr.bf16.gmra.mxu0 %v122
  %v248 = vpop.f32.mrf.mxu0
  %v249 = vadd.f32 0.0, %v248
  %v250 = vpop.f32.mrf.mxu0
  %v251 = vpop.f32.mrf.mxu0
  %v252 = vadd.f32 0.0, %v251
  %v253 = vpop.f32.mrf.mxu0
  %254 = vmatprep.mubr.bf16.mxu0 0
  %255 = vmatmul.mubr.bf16.gmra.mxu0 %v123
  %v256 = vpop.f32.mrf.mxu0
  %v257 = vadd.f32 0.0, %v256
  %v258 = vpop.f32.mrf.mxu0
  %v259 = vpop.f32.mrf.mxu0
  %v260 = vadd.f32 0.0, %v259
  %v261 = vpop.f32.mrf.mxu0
  %262 = vmatprep.mubr.bf16.mxu0 0
  %263 = vmatmul.mubr.bf16.gmra.mxu0 %v124
  %v264 = vpop.f32.mrf.mxu0
  %v265 = vadd.f32 0.0, %v264
  %v266 = vpop.f32.mrf.mxu0
  %v267 = vpop.f32.mrf.mxu0
  %v268 = vadd.f32 0.0, %v267
  %v269 = vpop.f32.mrf.mxu0
  %270 = vmatprep.mubr.bf16.mxu0 0
  %271 = vmatmul.mubr.bf16.gmra.mxu0 %v125
  %v272 = vpop.f32.mrf.mxu0
  %v273 = vadd.f32 0.0, %v272
  %v274 = vpop.f32.mrf.mxu0
  %v275 = vpop.f32.mrf.mxu0
  %v276 = vadd.f32 0.0, %v275
  %v277 = vpop.f32.mrf.mxu0
  %278 = vdwg.mxu0
  %v279 = vadd.f32 %v38, %v217
  %v280 = vadd.f32 %v39, %v220
  %v281 = vadd.f32 %v40, %v225
  %v282 = vadd.f32 %v41, %v228
  %v283 = vadd.f32 %v42, %v233
  %v284 = vadd.f32 %v43, %v236
  %v285 = vadd.f32 %v44, %v241
  %v286 = vadd.f32 %v45, %v244
  %v287 = vadd.f32 %v46, %v249
  %v288 = vadd.f32 %v47, %v252
  %v289 = vadd.f32 %v48, %v257
  %v290 = vadd.f32 %v49, %v260
  %v291 = vadd.f32 %v50, %v265
  %v292 = vadd.f32 %v51, %v268
  %v293 = vadd.f32 %v52, %v273
  %v294 = vadd.f32 %v53, %v276
  %295 = vst [vmem:[#allocation2] sm:$0xff] %v279
  %296 = vst [vmem:[#allocation2 + $0x8] sm:$0xff] %v280
  %297 = vst [vmem:[#allocation2 + $0x10] sm:$0xff] %v281
  %298 = vst [vmem:[#allocation2 + $0x18] sm:$0xff] %v282
  %299 = vst [vmem:[#allocation2 + $0x20] sm:$0xff] %v283
  %300 = vst [vmem:[#allocation2 + $0x28] sm:$0xff] %v284
  %301 = vst [vmem:[#allocation2 + $0x30] sm:$0xff] %v285
  %302 = vst [vmem:[#allocation2 + $0x38] sm:$0xff] %v286
  %303 = vst [vmem:[#allocation2 + $0x40] sm:$0xff] %v287
  %304 = vst [vmem:[#allocation2 + $0x48] sm:$0xff] %v288
  %305 = vst [vmem:[#allocation2 + $0x50] sm:$0xff] %v289
  %306 = vst [vmem:[#allocation2 + $0x58] sm:$0xff] %v290
  %307 = vst [vmem:[#allocation2 + $0x60] sm:$0xff] %v291
  %308 = vst [vmem:[#allocation2 + $0x68] sm:$0xff] %v292
  %309 = vst [vmem:[#allocation2 + $0x70] sm:$0xff] %v293
  %310 = vst [vmem:[#allocation2 + $0x78] sm:$0xff] %v294
  // Predicated region
  $region22: #{gcn_forward.6} parent=0 // pred_check
    %p311 = pneg %p18
  $region23: #{gcn_forward.6} parent=0 // pred_check_branch
    %313 = sbr.rel (%p311) target = $region25
  $region24: #{gcn_forward.6} parent=0 // pred_region
    %v314 = vld [vmem:[#allocation2] sm:$0xff]
    %v315 = vld [vmem:[#allocation2 + $0x8] sm:$0xff]
    %v316 = vld [vmem:[#allocation2 + $0x10] sm:$0xff]
    %v317 = vld [vmem:[#allocation2 + $0x18] sm:$0xff]
    %v318 = vld [vmem:[#allocation2 + $0x20] sm:$0xff]
    %v319 = vld [vmem:[#allocation2 + $0x28] sm:$0xff]
    %v320 = vld [vmem:[#allocation2 + $0x30] sm:$0xff]
    %v321 = vld [vmem:[#allocation2 + $0x38] sm:$0xff]
    %v322 = vld [vmem:[#allocation2 + $0x40] sm:$0xff]
    %v323 = vld [vmem:[#allocation2 + $0x48] sm:$0xff]
    %v324 = vld [vmem:[#allocation2 + $0x50] sm:$0xff]
    %v325 = vld [vmem:[#allocation2 + $0x58] sm:$0xff]
    %v326 = vld [vmem:[#allocation2 + $0x60] sm:$0xff]
    %v327 = vld [vmem:[#allocation2 + $0x68] sm:$0xff]
    %v328 = vld [vmem:[#allocation2 + $0x70] sm:$0xff]
    %v329 = vld [vmem:[#allocation2 + $0x78] sm:$0xff]
    %v330 = vld [vmem:[%s2] sm:$0xff]
    %v331 = vld [vmem:[%s2 + $0x8] sm:$0xff]
    %v332 = vld [vmem:[%s2 + $0x10] sm:$0xff]
    %v333 = vld [vmem:[%s2 + $0x18] sm:$0xff]
    %v334 = vld [vmem:[%s2 + $0x20] sm:$0xff]
    %v335 = vld [vmem:[%s2 + $0x28] sm:$0xff]
    %v336 = vld [vmem:[%s2 + $0x30] sm:$0xff]
    %v337 = vld [vmem:[%s2 + $0x38] sm:$0xff]
    %v338 = vld [vmem:[%s2 + $0x40] sm:$0xff]
    %v339 = vld [vmem:[%s2 + $0x48] sm:$0xff]
    %v340 = vld [vmem:[%s2 + $0x50] sm:$0xff]
    %v341 = vld [vmem:[%s2 + $0x58] sm:$0xff]
    %v342 = vld [vmem:[%s2 + $0x60] sm:$0xff]
    %v343 = vld [vmem:[%s2 + $0x68] sm:$0xff]
    %v344 = vld [vmem:[%s2 + $0x70] sm:$0xff]
    %v345 = vld [vmem:[%s2 + $0x78] sm:$0xff]
    %v346 = vld [vmem:[%s3] sm:$0x1]
    %v348 = vlaneseq
    %v349 = vshrl.u32 %v348, 7
    %v350 = vsub.s32 0, %v349
    %v351 = vrot.slane %v346, %v350
    %353 = vmatprep.subr.mxu0 0.0
    %354 = vmatpush1.msra.mxu0 %v345
    %355 = vmatprep.subr.mxu0 0.0
    %356 = vmatpush1.msra.mxu0 %v344
    %357 = vmatprep.subr.mxu0 0.0
    %358 = vmatpush1.msra.mxu0 %v343
    %359 = vmatprep.subr.mxu0 0.0
    %360 = vmatpush1.msra.mxu0 %v342
    %361 = vmatprep.subr.mxu0 0.0
    %362 = vmatpush1.msra.mxu0 %v341
    %363 = vmatprep.subr.mxu0 0.0
    %364 = vmatpush1.msra.mxu0 %v340
    %365 = vmatprep.subr.mxu0 0.0
    %366 = vmatpush1.msra.mxu0 %v339
    %367 = vmatprep.subr.mxu0 0.0
    %368 = vmatpush1.msra.mxu0 %v338
    %369 = vmatprep.subr.mxu0 0.0
    %370 = vmatpush1.msra.mxu0 %v337
    %371 = vmatprep.subr.mxu0 0.0
    %372 = vmatpush1.msra.mxu0 %v336
    %373 = vmatprep.subr.mxu0 0.0
    %374 = vmatpush1.msra.mxu0 %v335
    %375 = vmatprep.subr.mxu0 0.0
    %376 = vmatpush1.msra.mxu0 %v334
    %377 = vmatprep.subr.mxu0 0.0
    %378 = vmatpush1.msra.mxu0 %v333
    %379 = vmatprep.subr.mxu0 0.0
    %380 = vmatpush1.msra.mxu0 %v332
    %381 = vmatprep.subr.mxu0 0.0
    %382 = vmatpush1.msra.mxu0 %v331
    %383 = vmatprep.subr.mxu0 0.0
    %384 = vmatpush1.msra.mxu0 %v330
    %385 = vmatprep.subr.mxu0 0.0
    %386 = vmatpush2.msra.mxu0 0.0
    %387 = vmatprep.subr.mxu0 0.0
    %388 = vmatpush2.msra.mxu0 0.0
    %389 = vmatprep.subr.mxu0 0.0
    %390 = vmatpush2.msra.mxu0 0.0
    %391 = vmatprep.subr.mxu0 0.0
    %392 = vmatpush2.msra.mxu0 0.0
    %393 = vmatprep.subr.mxu0 0.0
    %394 = vmatpush2.msra.mxu0 0.0
    %395 = vmatprep.subr.mxu0 0.0
    %396 = vmatpush2.msra.mxu0 0.0
    %397 = vmatprep.subr.mxu0 0.0
    %398 = vmatpush2.msra.mxu0 0.0
    %399 = vmatprep.subr.mxu0 0.0
    %400 = vmatpush2.msra.mxu0 0.0
    %401 = vmatprep.subr.mxu0 0.0
    %402 = vmatpush2.msra.mxu0 0.0
    %403 = vmatprep.subr.mxu0 0.0
    %404 = vmatpush2.msra.mxu0 0.0
    %405 = vmatprep.subr.mxu0 0.0
    %406 = vmatpush2.msra.mxu0 0.0
    %407 = vmatprep.subr.mxu0 0.0
    %408 = vmatpush2.msra.mxu0 0.0
    %409 = vmatprep.subr.mxu0 0.0
    %410 = vmatpush2.msra.mxu0 0.0
    %411 = vmatprep.subr.mxu0 0.0
    %412 = vmatpush2.msra.mxu0 0.0
    %413 = vmatprep.subr.mxu0 0.0
    %414 = vmatpush2.msra.mxu0 0.0
    %415 = vmatprep.subr.mxu0 0.0
    %416 = vmatpush2.msra.mxu0 0.0
    %417 = vmatprep.mubr.f32.mxu0 0.0
    %418 = vmatmul.mubr.f32.gmra.mxu0 %v314
    %v419 = vpop.f32.mrf.mxu0
    %v420 = vadd.f32 %v351, %v419
    %v421 = vpop.f32.mrf.mxu0
    %422 = vmatprep.mubr.f32.mxu0 0.0
    %423 = vmatmul.mubr.f32.gmra.mxu0 %v315
    %v424 = vpop.f32.mrf.mxu0
    %v425 = vadd.f32 %v351, %v424
    %v426 = vpop.f32.mrf.mxu0
    %427 = vmatprep.mubr.f32.mxu0 0.0
    %428 = vmatmul.mubr.f32.gmra.mxu0 %v316
    %v429 = vpop.f32.mrf.mxu0
    %v430 = vadd.f32 %v351, %v429
    %v431 = vpop.f32.mrf.mxu0
    %432 = vmatprep.mubr.f32.mxu0 0.0
    %433 = vmatmul.mubr.f32.gmra.mxu0 %v317
    %v434 = vpop.f32.mrf.mxu0
    %v435 = vadd.f32 %v351, %v434
    %v436 = vpop.f32.mrf.mxu0
    %437 = vmatprep.mubr.f32.mxu0 0.0
    %438 = vmatmul.mubr.f32.gmra.mxu0 %v318
    %v439 = vpop.f32.mrf.mxu0
    %v440 = vadd.f32 %v351, %v439
    %v441 = vpop.f32.mrf.mxu0
    %442 = vmatprep.mubr.f32.mxu0 0.0
    %443 = vmatmul.mubr.f32.gmra.mxu0 %v319
    %v444 = vpop.f32.mrf.mxu0
    %v445 = vadd.f32 %v351, %v444
    %v446 = vpop.f32.mrf.mxu0
    %447 = vmatprep.mubr.f32.mxu0 0.0
    %448 = vmatmul.mubr.f32.gmra.mxu0 %v320
    %v449 = vpop.f32.mrf.mxu0
    %v450 = vadd.f32 %v351, %v449
    %v451 = vpop.f32.mrf.mxu0
    %452 = vmatprep.mubr.f32.mxu0 0.0
    %453 = vmatmul.mubr.f32.gmra.mxu0 %v321
    %v454 = vpop.f32.mrf.mxu0
    %v455 = vadd.f32 %v351, %v454
    %v456 = vpop.f32.mrf.mxu0
    %457 = vmatprep.mubr.f32.mxu0 0.0
    %458 = vmatmul.mubr.f32.gmra.mxu0 %v322
    %v459 = vpop.f32.mrf.mxu0
    %v460 = vadd.f32 %v351, %v459
    %v461 = vpop.f32.mrf.mxu0
    %462 = vmatprep.mubr.f32.mxu0 0.0
    %463 = vmatmul.mubr.f32.gmra.mxu0 %v323
    %v464 = vpop.f32.mrf.mxu0
    %v465 = vadd.f32 %v351, %v464
    %v466 = vpop.f32.mrf.mxu0
    %467 = vmatprep.mubr.f32.mxu0 0.0
    %468 = vmatmul.mubr.f32.gmra.mxu0 %v324
    %v469 = vpop.f32.mrf.mxu0
    %v470 = vadd.f32 %v351, %v469
    %v471 = vpop.f32.mrf.mxu0
    %472 = vmatprep.mubr.f32.mxu0 0.0
    %473 = vmatmul.mubr.f32.gmra.mxu0 %v325
    %v474 = vpop.f32.mrf.mxu0
    %v475 = vadd.f32 %v351, %v474
    %v476 = vpop.f32.mrf.mxu0
    %477 = vmatprep.mubr.f32.mxu0 0.0
    %478 = vmatmul.mubr.f32.gmra.mxu0 %v326
    %v479 = vpop.f32.mrf.mxu0
    %v480 = vadd.f32 %v351, %v479
    %v481 = vpop.f32.mrf.mxu0
    %482 = vmatprep.mubr.f32.mxu0 0.0
    %483 = vmatmul.mubr.f32.gmra.mxu0 %v327
    %v484 = vpop.f32.mrf.mxu0
    %v485 = vadd.f32 %v351, %v484
    %v486 = vpop.f32.mrf.mxu0
    %487 = vmatprep.mubr.f32.mxu0 0.0
    %488 = vmatmul.mubr.f32.gmra.mxu0 %v328
    %v489 = vpop.f32.mrf.mxu0
    %v490 = vadd.f32 %v351, %v489
    %v491 = vpop.f32.mrf.mxu0
    %492 = vmatprep.mubr.f32.mxu0 0.0
    %493 = vmatmul.mubr.f32.gmra.mxu0 %v329
    %v494 = vpop.f32.mrf.mxu0
    %v495 = vadd.f32 %v351, %v494
    %v496 = vpop.f32.mrf.mxu0
    %497 = vdwg.mxu0
    %v498 = vmax.f32 %v420, 0.0
    %v499 = vmax.f32 %v425, 0.0
    %v500 = vmax.f32 %v430, 0.0
    %v501 = vmax.f32 %v435, 0.0
    %v502 = vmax.f32 %v440, 0.0
    %v503 = vmax.f32 %v445, 0.0
    %v504 = vmax.f32 %v450, 0.0
    %v505 = vmax.f32 %v455, 0.0
    %v506 = vmax.f32 %v460, 0.0
    %v507 = vmax.f32 %v465, 0.0
    %v508 = vmax.f32 %v470, 0.0
    %v509 = vmax.f32 %v475, 0.0
    %v510 = vmax.f32 %v480, 0.0
    %v511 = vmax.f32 %v485, 0.0
    %v512 = vmax.f32 %v490, 0.0
    %v513 = vmax.f32 %v495, 0.0
    %v514 = vpack.c.bf16 %v499, %v498
    %v515 = vpack.c.bf16 %v501, %v500
    %v516 = vpack.c.bf16 %v503, %v502
    %v517 = vpack.c.bf16 %v505, %v504
    %v518 = vpack.c.bf16 %v507, %v506
    %v519 = vpack.c.bf16 %v509, %v508
    %v520 = vpack.c.bf16 %v511, %v510
    %v521 = vpack.c.bf16 %v513, %v512
    %v530 = vunpack.c.l.b16 %v514
    %v531 = vunpack.c.h.b16 %v514
    %v532 = vunpack.c.l.b16 %v515
    %v533 = vunpack.c.h.b16 %v515
    %v534 = vunpack.c.l.b16 %v516
    %v535 = vunpack.c.h.b16 %v516
    %v536 = vunpack.c.l.b16 %v517
    %v537 = vunpack.c.h.b16 %v517
    %v538 = vunpack.c.l.b16 %v518
    %v539 = vunpack.c.h.b16 %v518
    %v540 = vunpack.c.l.b16 %v519
    %v541 = vunpack.c.h.b16 %v519
    %v542 = vunpack.c.l.b16 %v520
    %v543 = vunpack.c.h.b16 %v520
    %v544 = vunpack.c.l.b16 %v521
    %v545 = vunpack.c.h.b16 %v521
    %v546 = vpack.c.b16 %v530, %v530
    %v547 = vpack.c.b16 %v531, %v531
    %v548 = vpack.c.b16 %v532, %v532
    %v549 = vpack.c.b16 %v533, %v533
    %v550 = vpack.c.b16 %v534, %v534
    %v551 = vpack.c.b16 %v535, %v535
    %v552 = vpack.c.b16 %v536, %v536
    %v553 = vpack.c.b16 %v537, %v537
    %v554 = vpack.c.b16 %v538, %v538
    %v555 = vpack.c.b16 %v539, %v539
    %v556 = vpack.c.b16 %v540, %v540
    %v557 = vpack.c.b16 %v541, %v541
    %v558 = vpack.c.b16 %v542, %v542
    %v559 = vpack.c.b16 %v543, %v543
    %v560 = vpack.c.b16 %v544, %v544
    %v561 = vpack.c.b16 %v545, %v545
    %578 = vst [vmem:[%s4] sm:$0xf] %v546
    %579 = vst [vmem:[%s4 + $0x4] sm:$0xf] %v547
    %580 = vst [vmem:[%s4 + $0x8] sm:$0xf] %v548
    %581 = vst [vmem:[%s4 + $0xc] sm:$0xf] %v549
    %582 = vst [vmem:[%s4 + $0x10] sm:$0xf] %v550
    %583 = vst [vmem:[%s4 + $0x14] sm:$0xf] %v551
    %584 = vst [vmem:[%s4 + $0x18] sm:$0xf] %v552
    %585 = vst [vmem:[%s4 + $0x1c] sm:$0xf] %v553
    %586 = vst [vmem:[%s4 + $0x20] sm:$0xf] %v554
    %587 = vst [vmem:[%s4 + $0x24] sm:$0xf] %v555
    %588 = vst [vmem:[%s4 + $0x28] sm:$0xf] %v556
    %589 = vst [vmem:[%s4 + $0x2c] sm:$0xf] %v557
    %590 = vst [vmem:[%s4 + $0x30] sm:$0xf] %v558
    %591 = vst [vmem:[%s4 + $0x34] sm:$0xf] %v559
    %592 = vst [vmem:[%s4 + $0x38] sm:$0xf] %v560
    %593 = vst [vmem:[%s4 + $0x3c] sm:$0xf] %v561
  $region25: #{gcn_forward.6} parent=0 // pred_fallthru
    _
  // Predicated region
  $region26: #{gcn_forward.6} parent=0 // pred_check
    _
  $region27: #{gcn_forward.6} parent=0 // pred_check_branch
    %595 = sbr.rel (0) target = $region29
  $region28: #{gcn_forward.6} parent=0 // pred_region
    _
  $region29: #{gcn_forward.6} parent=0 // pred_fallthru
    _
  // Predicated region
  $region30: #{gcn_forward.6} parent=0 // pred_check
    _
  $region31: #{gcn_forward.6} parent=0 // pred_check_branch
    %597 = sbr.rel (0) target = $region33
  $region32: #{gcn_forward.6} parent=0 // pred_region
    _
  $region33: #{gcn_forward.6} parent=0 // pred_fallthru
    _

</llo_original>
